<compile_context>
chip_gen: v6e
topology: v6e:2x2x1
jax: 0.10.0
libtpu: 0.0.40
codegen_flags: <defaults>
</compile_context>

<pallas_src>
import functools

import jax
import jax.numpy as jnp
from jax.experimental import pallas as pl
from jax.experimental.pallas import tpu as pltpu


def _adailn_kernel(x_ref, params_ref, o_ref, *, eps, hw, c):
    # x_ref: (1, C, HW)   params_ref: (1, C, 3) = [rho*gamma, (1-rho)*gamma, beta]
    n_in = float(hw)
    n_ln = float(c * hw)
    inv_nm1_in = 1.0 / (n_in - 1.0) if hw > 1 else float("nan")
    inv_nm1_ln = 1.0 / (n_ln - 1.0) if c * hw > 1 else float("nan")

    # ---- single stats pass: per-channel sum and sum-of-squares (f32 acc) ----
    xs = x_ref[...].astype(jnp.float32)
    ch_sum = jnp.sum(xs, axis=2, keepdims=True)                 # (1, C, 1)
    ch_sqsum = jnp.sum(xs * xs, axis=2, keepdims=True)          # (1, C, 1)

    # instance-norm stats (unbiased, torch.var default)
    in_mean = ch_sum * (1.0 / n_in)
    in_var = (ch_sqsum - n_in * in_mean * in_mean) * inv_nm1_in
    in_var = jnp.maximum(in_var, 0.0)                           # guard cancellation

    # layer-norm stats derived from the same per-channel partials ((C,1) math)
    tot_sum = jnp.sum(ch_sum, axis=1, keepdims=True)            # (1, 1, 1)
    tot_sqsum = jnp.sum(ch_sqsum, axis=1, keepdims=True)        # (1, 1, 1)
    ln_mean = tot_sum * (1.0 / n_ln)
    ln_var = (tot_sqsum - n_ln * ln_mean * ln_mean) * inv_nm1_ln
    ln_var = jnp.maximum(ln_var, 0.0)

    inv_in = jax.lax.rsqrt(in_var + eps)                        # (1, C, 1)
    inv_ln = jax.lax.rsqrt(ln_var + eps)                        # (1, 1, 1)

    # ---- fold rho-blend + affine into a single per-channel scale/shift ------
    p = params_ref[...].astype(jnp.float32)                     # (1, C, 3)
    a = p[:, :, 0:1] * inv_in                                   # rho*gamma / std_in
    b = p[:, :, 1:2] * inv_ln                                   # (1-rho)*gamma / std_ln
    scale = a + b                                               # (1, C, 1)
    shift = p[:, :, 2:3] - a * in_mean - b * ln_mean            # (1, C, 1)

    # ---- apply pass: out = rho*out_in + (1-rho)*out_ln, *gamma, +beta
    #      == x*scale + shift   (re-load x_ref so any bf16->f32 cast fuses here)
    o_ref[...] = (x_ref[...].astype(jnp.float32) * scale + shift).astype(o_ref.dtype)


def adailn_forward(x, gamma, beta, rho, *, eps=1e-5):
    """x: (B, C, H, W); gamma, beta: (B, C); rho: (1, C) or (1, C, 1, 1)."""
    B, C, H, W = x.shape
    HW = H * W
    x_flat = x.reshape(B, C, HW)                 # metadata-only reshape

    # Pack params on the host: [rho*gamma, (1-rho)*gamma, beta] -> (B, C, 3).
    rho_bc = jnp.broadcast_to(rho.reshape(1, C), (B, C)).astype(jnp.float32)
    g32 = gamma.reshape(B, C).astype(jnp.float32)
    b32 = beta.reshape(B, C).astype(jnp.float32)
    params = jnp.stack([rho_bc * g32, (1.0 - rho_bc) * g32, b32], axis=-1)

    # ---- VMEM budget: 2x double-buffered in + 2x out slabs (physical, padded
    #      to (8,128) tiles) + f32 temp for sub-32-bit inputs + headroom,
    #      capped at ~80% of this generation's physical VMEM.
    itemsize = jnp.dtype(x.dtype).itemsize
    cpad = -(-C // 8) * 8
    hwpad = -(-HW // 128) * 128
    slab_phys = cpad * hwpad * itemsize
    f32_tmp = cpad * hwpad * 4 if itemsize < 4 else 0
    needed = 4 * slab_phys + f32_tmp + (2 << 20)
    try:
        phys_vmem = int(pltpu.get_tpu_info().vmem_capacity_bytes)
    except Exception:
        phys_vmem = 64 << 20                     # conservative (v7x per-TC)
    cap = int(0.8 * phys_vmem)                   # ≈51 MiB v7x, ≈102 MiB v5e/v6e
    vmem_limit = min(max(needed, 32 << 20), cap)
    # TODO(synk): if `needed > cap` (very large C*HW, esp. v7x), switch to the
    # HW-tiled two-pass scheme instead of clamping here.

    cost = pl.CostEstimate(
        flops=8 * B * C * HW,
        transcendentals=2 * B * C,
        bytes_accessed=2 * B * C * HW * itemsize + params.size * 4,
    )

    kernel = functools.partial(_adailn_kernel, eps=eps, hw=HW, c=C)

    out_flat = pl.pallas_call(
        kernel,
        out_shape=jax.ShapeDtypeStruct((B, C, HW), x.dtype),
        grid_spec=pltpu.PrefetchScalarGridSpec(
            num_scalar_prefetch=0,
            grid=(B,),
            in_specs=[
                # full-array dims (C, HW) -> exempt from (8,128) divisibility;
                # Mosaic masks any ragged tail itself.
                pl.BlockSpec((1, C, HW), lambda b: (b, 0, 0)),   # x slab
                pl.BlockSpec((1, C, 3), lambda b: (b, 0, 0)),    # packed params
            ],
            out_specs=pl.BlockSpec((1, C, HW), lambda b: (b, 0, 0)),
        ),
        compiler_params=pltpu.CompilerParams(
            dimension_semantics=("parallel",),
            vmem_limit_bytes=vmem_limit,
        ),
        cost_estimate=cost,
    )(x_flat, params)

    return out_flat.reshape(B, C, H, W)


def adailn_reference(x, gamma, beta, rho, *, eps=1e-5):
    """Pure-JAX reference mirroring the PyTorch semantics (unbiased variance)."""
    B, C, H, W = x.shape
    HW = H * W
    in_mean = jnp.mean(x, axis=(2, 3), keepdims=True)
    in_var = jnp.sum((x - in_mean) ** 2, axis=(2, 3), keepdims=True) / (HW - 1)
    out_in = (x - in_mean) / jnp.sqrt(in_var + eps)
    ln_mean = jnp.mean(x, axis=(1, 2, 3), keepdims=True)
    ln_var = jnp.sum((x - ln_mean) ** 2, axis=(1, 2, 3), keepdims=True) / (C * HW - 1)
    out_ln = (x - ln_mean) / jnp.sqrt(ln_var + eps)
    rho4 = rho.reshape(1, C, 1, 1)
    out = rho4 * out_in + (1.0 - rho4) * out_ln
    return out * gamma[:, :, None, None] + beta[:, :, None, None]


if __name__ == "__main__":
    B, C, H, W = 2, 4, 16, 16
    key = jax.random.PRNGKey(0)
    kx, kg, kb = jax.random.split(key, 3)

    x = jax.random.normal(kx, (B, C, H, W), dtype=jnp.float32)
    gamma = jax.random.normal(kg, (B, C), dtype=jnp.float32)
    beta = jax.random.normal(kb, (B, C), dtype=jnp.float32)
    # Parameter rho initialized as in adaILN.__init__: fill_(0.9), shape (1, C, 1, 1)
    rho = jnp.full((1, C), 0.9, dtype=jnp.float32)

    out = adailn_forward(x, gamma, beta, rho, eps=1e-5)
    out = jax.block_until_ready(out)

    ref = adailn_reference(x, gamma, beta, rho, eps=1e-5)
    assert out.shape == (B, C, H, W)
    assert jnp.allclose(out, ref, atol=1e-5, rtol=1e-5), "mismatch vs reference"

    print("KERNEL_OK")
</pallas_src>

<mosaic_0001>
module attributes {stable_mosaic.version = 11 : i64} {
  func.func @_adailn_kernel(%arg0: i32, %arg1: memref<1x4x256xf32, #tpu.memory_space<vmem>>, %arg2: memref<1x4x3xf32, #tpu.memory_space<vmem>>, %arg3: memref<1x4x256xf32, #tpu.memory_space<vmem>>) attributes {dimension_semantics = [#tpu.dimension_semantics<parallel>], iteration_bounds = array<i64: 2>, scalar_prefetch = 0 : i64, scratch_operands = 0 : i64, tpu.core_type = #tpu.core_type<tc>, window_params = [{transform_indices = @transform_0, window_bounds = array<i64: 1, 4, 256>}, {transform_indices = @transform_1, window_bounds = array<i64: 1, 4, 3>}, {transform_indices = @transform_2, window_bounds = array<i64: 1, 4, 256>}]} {
    %c0 = arith.constant 0 : index
    %c0_0 = arith.constant 0 : index
    %c0_1 = arith.constant 0 : index
    %0 = vector.load %arg1[%c0, %c0_0, %c0_1] : memref<1x4x256xf32, #tpu.memory_space<vmem>>, vector<1x4x256xf32>
    %cst = arith.constant dense<0.000000e+00> : vector<1x4xf32>
    %1 = vector.multi_reduction <add>, %0, %cst [2] : vector<1x4x256xf32> to vector<1x4xf32>
    %2 = vector.shape_cast %1 : vector<1x4xf32> to vector<1x4x1xf32>
    %3 = arith.mulf %0, %0 : vector<1x4x256xf32>
    %cst_2 = arith.constant dense<0.000000e+00> : vector<1x4xf32>
    %4 = vector.multi_reduction <add>, %3, %cst_2 [2] : vector<1x4x256xf32> to vector<1x4xf32>
    %5 = vector.shape_cast %4 : vector<1x4xf32> to vector<1x4x1xf32>
    %cst_3 = arith.constant 3.906250e-03 : f32
    %6 = vector.broadcast %cst_3 : f32 to vector<1x4x1xf32>
    %7 = arith.mulf %2, %6 : vector<1x4x1xf32>
    %cst_4 = arith.constant 2.560000e+02 : f32
    %8 = vector.broadcast %cst_4 : f32 to vector<1x4x1xf32>
    %9 = arith.mulf %8, %7 : vector<1x4x1xf32>
    %10 = arith.mulf %9, %7 : vector<1x4x1xf32>
    %11 = arith.subf %5, %10 : vector<1x4x1xf32>
    %cst_5 = arith.constant 0.00392156886 : f32
    %12 = vector.broadcast %cst_5 : f32 to vector<1x4x1xf32>
    %13 = arith.mulf %11, %12 : vector<1x4x1xf32>
    %cst_6 = arith.constant 0.000000e+00 : f32
    %14 = vector.broadcast %cst_6 : f32 to vector<1x4x1xf32>
    %15 = arith.maximumf %13, %14 : vector<1x4x1xf32>
    %cst_7 = arith.constant dense<0.000000e+00> : vector<1x1xf32>
    %16 = vector.multi_reduction <add>, %2, %cst_7 [1] : vector<1x4x1xf32> to vector<1x1xf32>
    %17 = vector.shape_cast %16 : vector<1x1xf32> to vector<1x1x1xf32>
    %cst_8 = arith.constant dense<0.000000e+00> : vector<1x1xf32>
    %18 = vector.multi_reduction <add>, %5, %cst_8 [1] : vector<1x4x1xf32> to vector<1x1xf32>
    %19 = vector.shape_cast %18 : vector<1x1xf32> to vector<1x1x1xf32>
    %cst_9 = arith.constant 9.765625E-4 : f32
    %20 = vector.broadcast %cst_9 : f32 to vector<1x1x1xf32>
    %21 = arith.mulf %17, %20 : vector<1x1x1xf32>
    %cst_10 = arith.constant 1.024000e+03 : f32
    %22 = vector.broadcast %cst_10 : f32 to vector<1x1x1xf32>
    %23 = arith.mulf %22, %21 : vector<1x1x1xf32>
    %24 = arith.mulf %23, %21 : vector<1x1x1xf32>
    %25 = arith.subf %19, %24 : vector<1x1x1xf32>
    %cst_11 = arith.constant 9.77517105E-4 : f32
    %26 = vector.broadcast %cst_11 : f32 to vector<1x1x1xf32>
    %27 = arith.mulf %25, %26 : vector<1x1x1xf32>
    %cst_12 = arith.constant 0.000000e+00 : f32
    %28 = vector.broadcast %cst_12 : f32 to vector<1x1x1xf32>
    %29 = arith.maximumf %27, %28 : vector<1x1x1xf32>
    %cst_13 = arith.constant 9.99999974E-6 : f32
    %30 = vector.broadcast %cst_13 : f32 to vector<1x4x1xf32>
    %31 = arith.addf %15, %30 : vector<1x4x1xf32>
    %32 = math.rsqrt %31 : vector<1x4x1xf32>
    %cst_14 = arith.constant 9.99999974E-6 : f32
    %33 = vector.broadcast %cst_14 : f32 to vector<1x1x1xf32>
    %34 = arith.addf %29, %33 : vector<1x1x1xf32>
    %35 = math.rsqrt %34 : vector<1x1x1xf32>
    %c0_15 = arith.constant 0 : index
    %c0_16 = arith.constant 0 : index
    %c0_17 = arith.constant 0 : index
    %36 = vector.load %arg2[%c0_15, %c0_16, %c0_17] : memref<1x4x3xf32, #tpu.memory_space<vmem>>, vector<1x4x3xf32>
    %37 = vector.extract_strided_slice %36 {offsets = [0, 0, 0], sizes = [1, 4, 1], strides = [1, 1, 1]} : vector<1x4x3xf32> to vector<1x4x1xf32>
    %38 = arith.mulf %37, %32 : vector<1x4x1xf32>
    %39 = vector.extract_strided_slice %36 {offsets = [0, 0, 1], sizes = [1, 4, 1], strides = [1, 1, 1]} : vector<1x4x3xf32> to vector<1x4x1xf32>
    %40 = vector.broadcast %35 : vector<1x1x1xf32> to vector<1x4x1xf32>
    %41 = arith.mulf %39, %40 : vector<1x4x1xf32>
    %42 = arith.addf %38, %41 : vector<1x4x1xf32>
    %43 = vector.extract_strided_slice %36 {offsets = [0, 0, 2], sizes = [1, 4, 1], strides = [1, 1, 1]} : vector<1x4x3xf32> to vector<1x4x1xf32>
    %44 = arith.mulf %38, %7 : vector<1x4x1xf32>
    %45 = arith.subf %43, %44 : vector<1x4x1xf32>
    %46 = vector.broadcast %21 : vector<1x1x1xf32> to vector<1x4x1xf32>
    %47 = arith.mulf %41, %46 : vector<1x4x1xf32>
    %48 = arith.subf %45, %47 : vector<1x4x1xf32>
    %c0_18 = arith.constant 0 : index
    %c0_19 = arith.constant 0 : index
    %c0_20 = arith.constant 0 : index
    %49 = vector.load %arg1[%c0_18, %c0_19, %c0_20] : memref<1x4x256xf32, #tpu.memory_space<vmem>>, vector<1x4x256xf32>
    %50 = vector.broadcast %42 : vector<1x4x1xf32> to vector<1x4x256xf32>
    %51 = arith.mulf %49, %50 : vector<1x4x256xf32>
    %52 = vector.broadcast %48 : vector<1x4x1xf32> to vector<1x4x256xf32>
    %53 = arith.addf %51, %52 : vector<1x4x256xf32>
    %c0_21 = arith.constant 0 : index
    %c0_22 = arith.constant 0 : index
    %c0_23 = arith.constant 0 : index
    %54 = vector.load %arg3[%c0_21, %c0_22, %c0_23] : memref<1x4x256xf32, #tpu.memory_space<vmem>>, vector<1x4x256xf32>
    tpu.vector_store %arg3[%c0_21, %c0_22, %c0_23], %53 {strides = array<i32>} : memref<1x4x256xf32, #tpu.memory_space<vmem>>, vector<1x4x256xf32>,
    return
  }
  func.func @transform_0(%arg0: i32) -> (i32, i32, i32) {
    %c0_i32 = arith.constant 0 : i32
    %c0_i32_0 = arith.constant 0 : i32
    %c0_i32_1 = arith.constant 0 : i32
    return %arg0, %c0_i32, %c0_i32_0 : i32, i32, i32
  }
  func.func @transform_1(%arg0: i32) -> (i32, i32, i32) {
    %c0_i32 = arith.constant 0 : i32
    %c0_i32_0 = arith.constant 0 : i32
    %c0_i32_1 = arith.constant 0 : i32
    return %arg0, %c0_i32, %c0_i32_0 : i32, i32, i32
  }
  func.func @transform_2(%arg0: i32) -> (i32, i32, i32) {
    %c0_i32 = arith.constant 0 : i32
    %c0_i32_0 = arith.constant 0 : i32
    %c0_i32_1 = arith.constant 0 : i32
    return %arg0, %c0_i32, %c0_i32_0 : i32, i32, i32
  }
}

</mosaic_0001>

<llo_original>
// kernel: tpu_custom_call.1
$region0: #{tpu_custom_call.1}
  #allocation0 [shape = 'u32[]', space=smem, size = 0x4, offset = 0x4, fixed_abs, tag = 'smem constant byte address 0x4 - core index']
  #allocation1 [shape = 'u32[144,128]{1,0:T(1,128)}', space=vmem, size = 0x12000, scoped, tag = 'internal scratch']
  %s0 = inlined_call_operand.hbm [shape: f32[2,4,256], index: 0, kind: input, shape index: {}]
  %s1 = inlined_call_operand.vmem [shape: f32[2,4,3], index: 1, kind: input, shape index: {}]
  %s2 = inlined_call_operand.hbm [shape: f32[2,4,256], index: 2, kind: output, shape index: {}]
  %s3 = sld [smem:[#allocation0]]
  $region45: #{tpu_custom_call.1} parent=0
    _
  %s5 = ssub.s32 1, %s3
  %s6 = scalar_select 0, %s5, %s3
  $region1: #{tpu_custom_call.1} parent=0
    #allocation2 [shape = 'u8[8192]{0}', space=vmem, size = 0x2000, scoped, tag = 'input window, operand 0']
    #allocation3 [shape = 's32[2]{0}', space=sflag, size = 0x8, scoped, tag = 'scoped memory for tpu_custom_call.1']
    #allocation4 [shape = 's32[2]{0}', space=sflag, size = 0x8, scoped, tag = 'scoped memory for tpu_custom_call.1']
    #allocation5 [shape = 'u8[8192]{0}', space=vmem, size = 0x2000, scoped, tag = 'output window, operand 0']
    %7 = vsyncpa [#allocation3], 0
    %s8 = scalar_lea.sflag [#allocation3], 1
    %9 = vsyncpa %s8, 0
    %10 = vsyncpa [#allocation4], 0
    %s11 = scalar_lea.sflag [#allocation4], 1
    %12 = vsyncpa %s11, 0
    loop: start=0, step=1, limit=4
    $region2: #{tpu_custom_call.1} parent=1 // loop_pre_header
      _
    $region3: #{tpu_custom_call.1} parent=1 // loop_header
      %s14 = sphi 0, %s18
      %p15 = scmp.ge.s32.totalorder %s14, 4
      %s24 = sphi 0, %s26
      %s27 = sphi 0, %s24
      %s28 = sphi 0, %s27
      %s44 = sphi 0, %s28
      %s50 = sphi 0, %s52
      %s53 = sphi 0, %s50
      %s54 = sphi 0, %s53
      %s70 = sphi 0, %s54
      %s76 = sphi 0, %s78
      %s79 = sphi 0, %s76
      %s80 = sphi 0, %s79
      %s96 = sphi 0, %s80
    $region4: #{tpu_custom_call.1} parent=1 // loop_header_branch
      %17 = sbr.rel (%p15) target = $region8
    $region5: #{tpu_custom_call.1} parent=1 // loop_body
      %s19 = ssub.s32 %s14, 1
      %s20 = ssub.s32 %s14, 2
      %s21 = sadd.s32 %s14, 1
      %s22 = ssub.s32 %s14, %s21
      %p23 = scmp.eq.s32.totalorder %s22, 0
      %s25 = sadd.s32 %s24, 1
      %s26 = scalar_select %p23, %s24, %s25
      %p29 = pneg %p23
      %p30 = scmp.eq.s32.totalorder %s14, 1
      %p31 = por %p29, %p30
      %p32 = scmp.ne.s32.totalorder %s24, %s27
      %p33 = scmp.eq.s32.totalorder %s14, 0
      %p34 = por %p32, %p33
      %p35 = scmp.ne.s32.totalorder %s24, %s27
      %p36 = scmp.eq.s32.totalorder %s19, 1
      %p37 = por %p35, %p36
      %p38 = scmp.ne.s32.totalorder %s27, %s28
      %p39 = scmp.eq.s32.totalorder %s19, 0
      %p40 = por %p38, %p39
      %p41 = scmp.ne.s32.totalorder %s27, %s28
      %p42 = scmp.eq.s32.totalorder %s20, 1
      %p43 = por %p41, %p42
      %p45 = scmp.ne.s32.totalorder %s28, %s44
      %p46 = scmp.eq.s32.totalorder %s20, 0
      %p47 = por %p45, %p46
      %s48 = ssub.s32 %s14, %s21
      %p49 = scmp.eq.s32.totalorder %s48, 0
      %s51 = sadd.s32 %s50, 1
      %s52 = scalar_select %p49, %s50, %s51
      %p55 = pneg %p49
      %p56 = scmp.eq.s32.totalorder %s14, 1
      %p57 = por %p55, %p56
      %p58 = scmp.ne.s32.totalorder %s50, %s53
      %p59 = scmp.eq.s32.totalorder %s14, 0
      %p60 = por %p58, %p59
      %p61 = scmp.ne.s32.totalorder %s50, %s53
      %p62 = scmp.eq.s32.totalorder %s19, 1
      %p63 = por %p61, %p62
      %p64 = scmp.ne.s32.totalorder %s53, %s54
      %p65 = scmp.eq.s32.totalorder %s19, 0
      %p66 = por %p64, %p65
      %p67 = scmp.ne.s32.totalorder %s53, %s54
      %p68 = scmp.eq.s32.totalorder %s20, 1
      %p69 = por %p67, %p68
      %p71 = scmp.ne.s32.totalorder %s54, %s70
      %p72 = scmp.eq.s32.totalorder %s20, 0
      %p73 = por %p71, %p72
      %s74 = ssub.s32 %s14, %s21
      %p75 = scmp.eq.s32.totalorder %s74, 0
      %s77 = sadd.s32 %s76, 1
      %s78 = scalar_select %p75, %s76, %s77
      %p81 = pneg %p75
      %p82 = scmp.eq.s32.totalorder %s14, 1
      %p83 = por %p81, %p82
      %p84 = scmp.ne.s32.totalorder %s76, %s79
      %p85 = scmp.eq.s32.totalorder %s14, 0
      %p86 = por %p84, %p85
      %p87 = scmp.ne.s32.totalorder %s76, %s79
      %p88 = scmp.eq.s32.totalorder %s19, 1
      %p89 = por %p87, %p88
      %p90 = scmp.ne.s32.totalorder %s79, %s80
      %p91 = scmp.eq.s32.totalorder %s19, 0
      %p92 = por %p90, %p91
      %p93 = scmp.ne.s32.totalorder %s79, %s80
      %p94 = scmp.eq.s32.totalorder %s20, 1
      %p95 = por %p93, %p94
      %p97 = scmp.ne.s32.totalorder %s80, %s96
      %p98 = scmp.eq.s32.totalorder %s20, 0
      %p99 = por %p97, %p98
      %p100 = scmp.le.s32.totalorder 1, %s14
      %p101 = scmp.lt.s32.totalorder %s14, 3
      %p102 = pnand %p100, %p101
      %p103 = pneg %p102
      // Predicated region
      $region9: #{tpu_custom_call.1} parent=5 // pred_check
        _
      $region10: #{tpu_custom_call.1} parent=5 // pred_check_branch
        %105 = sbr.rel (%p102) target = $region12
      $region11: #{tpu_custom_call.1} parent=5 // pred_region
        %s106 = ssub.s32 %s14, 1
      $region12: #{tpu_custom_call.1} parent=5 // pred_fallthru
        _
      %p107 = scmp.lt.s32.totalorder %s14, 2
      // Predicated region
      $region13: #{tpu_custom_call.1} parent=5 // pred_check
        %p108 = pneg %p107
      $region14: #{tpu_custom_call.1} parent=5 // pred_check_branch
        %110 = sbr.rel (%p108) target = $region16
      $region15: #{tpu_custom_call.1} parent=5 // pred_region
        // Predicated region
        $region17: #{tpu_custom_call.1} parent=15 // pred_check
          %p111 = pneg %p34
        $region18: #{tpu_custom_call.1} parent=15 // pred_check_branch
          %113 = sbr.rel (%p111) target = $region20
        $region19: #{tpu_custom_call.1} parent=15 // pred_region
          %s114 = sand.u32 %s24, 1
          %s115 = scalar_lea.sflag [#allocation3], %s114
          %s116 = sand.u32 %s24, 1
          %s117 = smul.addr %s116, 8
          %s118 = scalar_lea.vmem [#allocation2], %s117
          %s120 = ssub.s32 128, 128
          %121 = vsyncadd %s115, %s120
          %s122 = smul.addr %s14, 2
          %s123 = smul.addr %s122, 64
          %s124 = scalar_lea.hbm %s0, %s123
          %s126 = sshll.u32 %s118, 4
          %s127 = int_to_ptr.vmem [resolvable:$true] %s126
          %129 = dma.hbm_to_vmem [thread:$0]  %s124, 128, %s127, %s115
        $region20: #{tpu_custom_call.1} parent=15 // pred_fallthru
          _
        // Predicated region
        $region21: #{tpu_custom_call.1} parent=15 // pred_check
          %p130 = pneg %p60
        $region22: #{tpu_custom_call.1} parent=15 // pred_check_branch
          %132 = sbr.rel (%p130) target = $region24
        $region23: #{tpu_custom_call.1} parent=15 // pred_region
          %p133 = scmp.lt.s32.totalorder %s14, 1
          %s134 = scalar_select %p133, %s14, 1
          %s135 = smul.addr %s134, 4
          %s136 = scalar_lea.vmem %s1, %s135
        $region24: #{tpu_custom_call.1} parent=15 // pred_fallthru
          _
      $region16: #{tpu_custom_call.1} parent=5 // pred_fallthru
        _
      %p137 = scmp.le.s32.totalorder 1, %s14
      %p138 = scmp.lt.s32.totalorder %s14, 3
      %p139 = pnand %p137, %p138
      %p140 = pneg %p139
      // Predicated region
      $region25: #{tpu_custom_call.1} parent=5 // pred_check
        _
      $region26: #{tpu_custom_call.1} parent=5 // pred_check_branch
        %142 = sbr.rel (%p139) target = $region28
      $region27: #{tpu_custom_call.1} parent=5 // pred_region
        %s143 = ssub.s32 %s14, 1
        %s144 = sand.u32 %s27, 1
        %s145 = scalar_lea.sflag [#allocation3], %s144
        %s146 = sand.u32 %s27, 1
        %s147 = smul.addr %s146, 8
        %s148 = scalar_lea.vmem [#allocation2], %s147
        // Predicated region
        $region29: #{tpu_custom_call.1} parent=27 // pred_check
          %p149 = pneg %p40
        $region30: #{tpu_custom_call.1} parent=27 // pred_check_branch
          %151 = sbr.rel (%p149) target = $region32
        $region31: #{tpu_custom_call.1} parent=27 // pred_region
          %152 = dma.done %s145, 128
        $region32: #{tpu_custom_call.1} parent=27 // pred_fallthru
          _
        %s153 = sand.u32 %s27, 1
        %s154 = scalar_lea.sflag [#allocation3], %s153
        %s155 = sand.u32 %s27, 1
        %s156 = smul.addr %s155, 8
        %s157 = scalar_lea.vmem [#allocation2], %s156
        %p158 = pneg %p40
        %p159 = pneg %p37
        %p160 = scmp.lt.s32.totalorder %s19, 1
        %s161 = scalar_select %p160, %s19, 1
        %s162 = smul.addr %s161, 4
        %s163 = scalar_lea.vmem %s1, %s162
        %p164 = pneg %p66
        %p165 = pneg %p63
        %p166 = pneg %p92
        %p167 = pneg %p89
        %s168 = sand.u32 %s79, 1
        %s169 = scalar_lea.sflag [#allocation4], %s168
        %s170 = sand.u32 %s79, 1
        %s171 = smul.addr %s170, 8
        %s172 = scalar_lea.vmem [#allocation5], %s171
        %p173 = scmp.lt.s32.totalorder %s19, 1
        %s174 = scalar_select %p173, %s19, 1
        %s175 = smul.addr %s174, 4
        %s176 = scalar_lea.vmem %s1, %s175
        %v177 = vld [vmem:[%s148] sm:$0xff]
        %v179 = vcombine.high %v177, %v177
        %vm181 = vcmask 1043456
        %v182 = vsel %vm181, %v177, 0.0
        %v183 = vsel %vm181, %v179, 0.0
        %v184 = vadd.f32 %v182, %v183
        %185 = vadd.xlane.f32.xlu0 %v184
        %v186 = vpop.xlane.xlu0 %185
        %v187 = vmul.f32 %v177, %v177
        %v189 = vcombine.high %v187, %v187
        %v191 = vsel %vm181, %v187, 0.0
        %v192 = vsel %vm181, %v189, 0.0
        %v193 = vadd.f32 %v191, %v192
        %194 = vadd.xlane.f32.xlu0 %v193
        %v195 = vpop.xlane.xlu0 %194
        %v196 = vmul.f32 %v186, 0.00390625
        %v197 = vmul.f32 %v196, 256.0
        %v198 = vmul.f32 %v197, %v196
        %v199 = vsub.f32 %v195, %v198
        %v200 = vmul.f32 %v199, 0.003921569
        %v201 = vmax.f32 %v200, 0.0
        %v202 = vsel %vm181, %v186, 0.0
        %v203 = vrot.slane %v202, 4
        %v204 = vadd.f32 %v202, %v203
        %v205 = vrot.slane %v204, 2
        %v206 = vadd.f32 %v204, %v205
        %v207 = vrot.slane %v206, 1
        %v208 = vadd.f32 %v206, %v207
        %v209 = vsel %vm181, %v195, 0.0
        %v210 = vrot.slane %v209, 4
        %v211 = vadd.f32 %v209, %v210
        %v212 = vrot.slane %v211, 2
        %v213 = vadd.f32 %v211, %v212
        %v214 = vrot.slane %v213, 1
        %v215 = vadd.f32 %v213, %v214
        %v216 = vmul.f32 %v208, 0.0009765625
        %v217 = vmul.f32 %v216, 1024.0
        %v218 = vmul.f32 %v217, %v216
        %v219 = vsub.f32 %v215, %v218
        %v220 = vmul.f32 %v219, 0.0009775171
        %v221 = vmax.f32 %v220, 0.0
        %v222 = vadd.f32 %v201, 1e-05
        %v223 = vrsqrt.pop %v222
        %v224 = vadd.f32 %v221, 1e-05
        %v225 = vrsqrt.pop %v224
        %v226 = vld [vmem:[%s176] sm:$0xf]
        %v227 = vmul.f32 %v226, %v223
        %v228 = vmul.f32 %v226, %v225
        %230 = vrot.lane.b32.xlu0 %v228, 127
        %v231 = vpop.permute.xlu0 %230
        %v233 = vadd.f32 %v227, %v231
        %v234 = vmul.f32 %v227, %v196
        %236 = vrot.lane.b32.xlu0 %v234, 2
        %v237 = vpop.permute.xlu0 %236
        %v239 = vsub.f32 %v226, %v237
        %v240 = vmul.f32 %v228, %v216
        %242 = vrot.lane.b32.xlu0 %v240, 1
        %v243 = vpop.permute.xlu0 %242
        %v245 = vsub.f32 %v239, %v243
        %247 = vset.pattern.permute.xlu0 0
        %248 = vperm.xlu0 %247, %v233
        %v249 = vpop.permute.xlu0 %248
        %v251 = vunpack.c.l.s4 839922192
        %v252 = vunpack.c.0.s8 %v251
        %v253 = vlaneseq
        %v254 = vshrl.u32 %v253, 7
        %v255 = vsub.s32 %v252, %v254
        %v256 = vrot.slane %v249, %v255
        %v258 = vmul.f32 %v177, %v256
        %260 = vset.pattern.permute.xlu0 2
        %261 = vperm.xlu0 %260, %v245
        %v262 = vpop.permute.xlu0 %261
        %v264 = vunpack.c.l.s4 839922192
        %v265 = vunpack.c.0.s8 %v264
        %v266 = vlaneseq
        %v267 = vshrl.u32 %v266, 7
        %v268 = vsub.s32 %v265, %v267
        %v269 = vrot.slane %v262, %v268
        %v271 = vadd.f32 %v258, %v269
        %272 = vst [vmem:[%s172] sm:$0xff] %v271
        %s273 = sand.u32 %s79, 1
        %s274 = scalar_lea.sflag [#allocation4], %s273
        %s275 = sand.u32 %s79, 1
        %s276 = smul.addr %s275, 8
        %s277 = scalar_lea.vmem [#allocation5], %s276
        // Predicated region
        $region33: #{tpu_custom_call.1} parent=27 // pred_check
          %p278 = pneg %p89
        $region34: #{tpu_custom_call.1} parent=27 // pred_check_branch
          %280 = sbr.rel (%p278) target = $region36
        $region35: #{tpu_custom_call.1} parent=27 // pred_region
          %s282 = ssub.s32 128, 128
          %283 = vsyncadd %s274, %s282
          %s284 = smul.addr %s19, 2
          %s285 = smul.addr %s284, 64
          %s286 = scalar_lea.hbm %s2, %s285
          %s288 = sshll.u32 %s277, 4
          %s289 = int_to_ptr.vmem [resolvable:$true] %s288
          %291 = dma.vmem_to_hbm [thread:$0]  %s289, 128, %s286, %s274
        $region36: #{tpu_custom_call.1} parent=27 // pred_fallthru
          _
      $region28: #{tpu_custom_call.1} parent=5 // pred_fallthru
        _
      %p292 = scmp.le.s32.totalorder 2, %s14
      // Predicated region
      $region37: #{tpu_custom_call.1} parent=5 // pred_check
        %p293 = pneg %p292
      $region38: #{tpu_custom_call.1} parent=5 // pred_check_branch
        %295 = sbr.rel (%p293) target = $region40
      $region39: #{tpu_custom_call.1} parent=5 // pred_region
        %s296 = ssub.s32 %s14, 2
        // Predicated region
        $region41: #{tpu_custom_call.1} parent=39 // pred_check
          %p297 = pneg %p95
        $region42: #{tpu_custom_call.1} parent=39 // pred_check_branch
          %299 = sbr.rel (%p297) target = $region44
        $region43: #{tpu_custom_call.1} parent=39 // pred_region
          %s300 = sand.u32 %s80, 1
          %s301 = scalar_lea.sflag [#allocation4], %s300
          %s302 = sand.u32 %s80, 1
          %s303 = smul.addr %s302, 8
          %s304 = scalar_lea.vmem [#allocation5], %s303
          %305 = dma.done %s301, 128
        $region44: #{tpu_custom_call.1} parent=39 // pred_fallthru
          _
      $region40: #{tpu_custom_call.1} parent=5 // pred_fallthru
        _
    $region6: #{tpu_custom_call.1} parent=1 // loop_footer
      %s18 = sadd.s32 1, %s14
    $region7: #{tpu_custom_call.1} parent=1 // loop_footer_branch
      %13 = sbr.rel target = $region3
    $region8: #{tpu_custom_call.1} parent=1 // loop_exit
      _
    %306 = vsyncpa [#allocation3], 1
    %s307 = scalar_lea.sflag [#allocation3], 1
    %308 = vsyncpa %s307, 1
    %309 = vsyncpa [#allocation4], 1
    %s310 = scalar_lea.sflag [#allocation4], 1
    %311 = vsyncpa %s310, 1

</llo_original>
